<compile_context>
chip_gen: v6e
topology: v6e:2x2x1
jax: 0.10.0
libtpu: 0.0.40
codegen_flags: <defaults>
</compile_context>

<pallas_src>
import math

import jax
import jax.numpy as jnp
from jax import lax
from jax.experimental import pallas as pl
from jax.experimental.pallas import tpu as pltpu


def _round_up(x, m):
    return (x + m - 1) // m * m


def _vmem_limit_bytes():
    """Per-generation VMEM budget: ~100 MiB on 128-MiB chips, 48 MiB on v7x."""
    cap = 64 * 1024 * 1024
    try:
        info = pltpu.get_tpu_info()
        cap = int(getattr(info, "vmem_capacity_bytes", cap) or cap)
    except Exception:
        pass
    if cap >= 128 * 1024 * 1024:
        return 100 * 1024 * 1024
    return 48 * 1024 * 1024


def _pick_tm(M, Kp, Np, in_itemsize, out_itemsize, budget, big_vmem):
    """Largest M tile that fits the VMEM budget and gives >=2 tiles (megacore)."""
    if M <= 128:
        return max(8, _round_up(M, 8))
    cands = (1024, 512, 256, 128) if big_vmem else (512, 256, 128)
    for tm in cands:
        need = (2 * tm * Kp * in_itemsize        # double-buffered A tile
                + 2 * Kp * Np * in_itemsize      # resident weight (2 buffers)
                + 2 * tm * Np * out_itemsize     # double-buffered output tile
                + 2 * Np * 4)                    # bias
        if need <= budget and pl.cdiv(M, tm) >= 2:
            return tm
    return 128


def _choose_tile(padded, candidates=(512, 256, 128), min_tiles=1):
    for c in candidates:
        if padded % c == 0 and padded // c >= min_tiles:
            return c
    return 128


# ---------------------------------------------------------------------------
# Kernels
# ---------------------------------------------------------------------------
def _gemm_bias_resident_kernel(a_ref, w_ref, b_ref, o_ref):
    """A-tile x resident-weight GEMM with fused (pre-masked) bias epilogue.

    a_ref : (tm, Kp)  im2col activations            VMEM (streamed per M tile)
    w_ref : (Kp, Np)  masked, reshaped weights      VMEM (constant index -> 1 DMA)
    b_ref : (1,  Np)  masked bias (f32)             VMEM (constant index)
    o_ref : (tm, Np)  output tile                   VMEM
    """
    acc = jnp.dot(a_ref[...], w_ref[...], preferred_element_type=jnp.float32)
    o_ref[...] = (acc + b_ref[...].astype(jnp.float32)).astype(o_ref.dtype)


def _gemm_bias_tiled_kernel(a_ref, w_ref, b_ref, o_ref, acc_ref):
    """Fallback K-tiled GEMM with f32 VMEM accumulator (for very large weights)."""
    kk = pl.program_id(2)

    @pl.when(kk == 0)
    def _():
        acc_ref[...] = jnp.zeros_like(acc_ref)

    acc_ref[...] += jnp.dot(a_ref[...], w_ref[...],
                            preferred_element_type=jnp.float32)

    @pl.when(kk == pl.num_programs(2) - 1)
    def _():
        o_ref[...] = (acc_ref[...] +
                      b_ref[...].astype(jnp.float32)).astype(o_ref.dtype)


# ---------------------------------------------------------------------------
# Wrapper
# ---------------------------------------------------------------------------
def conv2d_layer_n(x_nchw, weight_oihw, bias, weight_aux,
                   *, stride=1, padding=0, dilation=1, groups=1,
                   compute_dtype=jnp.bfloat16):
    """Pallas implementation of Conv2DLayerN.forward (NCHW in/out)."""
    # TODO(synk): only stride=1, dilation=1, groups=1 are implemented in-kernel
    # (the module's defaults); other configs would need strided im2col.
    assert stride == 1 and dilation == 1 and groups == 1

    N, Cin, H, W = x_nchw.shape
    Cout, _, k, _ = weight_oihw.shape
    out_dtype = x_nchw.dtype

    # --- fold STE neuron mask into weights/bias (exact, mask is 0/1) ---------
    mask = (weight_aux.astype(jnp.float32) > 0).astype(jnp.float32)       # (Cout,)
    w_m = weight_oihw.astype(jnp.float32) * mask[:, None, None, None]
    if bias is not None:
        b_m = bias.astype(jnp.float32) * mask
    else:
        b_m = jnp.zeros((Cout,), jnp.float32)

    # --- im2col in JAX: cast to operand dtype BEFORE the k*k replication -----
    x = jnp.transpose(x_nchw, (0, 2, 3, 1)).astype(compute_dtype)         # NHWC
    if padding:
        x = jnp.pad(x, ((0, 0), (padding, padding), (padding, padding), (0, 0)))
    Hp, Wp = x.shape[1], x.shape[2]
    Ho, Wo = Hp - k + 1, Wp - k + 1

    K = k * k * Cin
    M = N * Ho * Wo
    Kp = _round_up(K, 128)
    Np = _round_up(Cout, 128)

    cols = [x[:, kh:kh + Ho, kw:kw + Wo, :] for kh in range(k) for kw in range(k)]
    if Kp > K:  # fold K padding into the single concat pass (no extra pad copy)
        cols.append(jnp.zeros((N, Ho, Wo, Kp - K), compute_dtype))
    a = jnp.concatenate(cols, axis=-1).reshape(M, Kp)          # (M, Kp), no M pad

    # (kh, kw, Cin, Cout) ordering matches the im2col concat order above.
    w2 = jnp.transpose(w_m, (2, 3, 1, 0)).reshape(K, Cout).astype(compute_dtype)
    w2 = jnp.pad(w2, ((0, Kp - K), (0, Np - Cout)))
    b2 = jnp.pad(b_m.reshape(1, Cout), ((0, 0), (0, Np - Cout)))

    in_itemsize = jnp.dtype(compute_dtype).itemsize
    out_itemsize = jnp.dtype(out_dtype).itemsize

    vmem_limit = _vmem_limit_bytes()
    budget = int(vmem_limit * 0.8)
    big_vmem = vmem_limit > 64 * 1024 * 1024

    cost = pl.CostEstimate(
        flops=2 * M * Kp * Np,
        transcendentals=0,
        bytes_accessed=(M * Kp * in_itemsize + Kp * Np * in_itemsize
                        + Np * 4 + M * Np * out_itemsize))

    w_resident_bytes = 2 * Kp * Np * in_itemsize
    if w_resident_bytes <= min(budget // 2, 24 * 1024 * 1024):
        # ---- resident-weight path: weights/bias DMA'd once, no K loop -------
        tm = _pick_tm(M, Kp, Np, in_itemsize, out_itemsize, budget, big_vmem)
        grid = (pl.cdiv(M, tm),)
        out = pl.pallas_call(
            _gemm_bias_resident_kernel,
            out_shape=jax.ShapeDtypeStruct((M, Np), out_dtype),
            grid=grid,
            in_specs=[
                pl.BlockSpec((tm, Kp), lambda i: (i, 0)),
                pl.BlockSpec((Kp, Np), lambda i: (0, 0)),   # constant -> resident
                pl.BlockSpec((1, Np), lambda i: (0, 0)),    # constant -> resident
            ],
            out_specs=pl.BlockSpec((tm, Np), lambda i: (i, 0)),
            compiler_params=pltpu.CompilerParams(
                dimension_semantics=("parallel",),
                vmem_limit_bytes=vmem_limit),
            cost_estimate=cost,
        )(a, w2, b2)
    else:
        # ---- fallback: K-tiled GEMM with f32 accumulator scratch ------------
        Mp = _round_up(M, 128)
        a = jnp.pad(a, ((0, Mp - M), (0, 0)))
        tm = _choose_tile(Mp, min_tiles=2) if Mp > 128 else 128
        tn = _choose_tile(Np)
        tk = _choose_tile(Kp)
        grid = (Mp // tm, Np // tn, Kp // tk)
        out = pl.pallas_call(
            _gemm_bias_tiled_kernel,
            out_shape=jax.ShapeDtypeStruct((Mp, Np), out_dtype),
            grid=grid,
            in_specs=[
                pl.BlockSpec((tm, tk), lambda i, j, l: (i, l)),
                pl.BlockSpec((tk, tn), lambda i, j, l: (l, j)),
                pl.BlockSpec((1, tn), lambda i, j, l: (0, j)),
            ],
            out_specs=pl.BlockSpec((tm, tn), lambda i, j, l: (i, j)),
            scratch_shapes=[pltpu.VMEM((tm, tn), jnp.float32)],
            compiler_params=pltpu.CompilerParams(
                dimension_semantics=("parallel", "parallel", "arbitrary"),
                vmem_limit_bytes=vmem_limit),
            cost_estimate=cost,
        )(a, w2, b2)
        out = out[:M]

    out = out[:, :Cout].reshape(N, Ho, Wo, Cout)
    return jnp.transpose(out, (0, 3, 1, 2))                    # back to NCHW


# ---------------------------------------------------------------------------
# Init / reference / test
# ---------------------------------------------------------------------------
def init_params(key, in_channels, out_channels, kernel_size=3):
    """Deterministic init mirroring Conv2DLayerN.reset_parameters shapes/ranges."""
    kw_key, aux_key, b_key = jax.random.split(key, 3)
    fan_in = in_channels * kernel_size * kernel_size
    bound = 1.0 / math.sqrt(fan_in)     # kaiming_uniform_(a=sqrt(5))
    weight = jax.random.uniform(
        kw_key, (out_channels, in_channels, kernel_size, kernel_size),
        minval=-bound, maxval=bound, dtype=jnp.float32)
    # uniform_(weight_aux) -> U[0,1); shift so some gates are closed (>0 matters)
    weight_aux = jax.random.uniform(
        aux_key, (out_channels,), dtype=jnp.float32) - 0.5
    bias = jax.random.uniform(
        b_key, (out_channels,), minval=-bound, maxval=bound, dtype=jnp.float32)
    return weight, weight_aux, bias


def reference_forward(x, weight, bias, weight_aux):
    """Pure-JAX reference matching F.conv2d + STE mask (for verification)."""
    out = lax.conv_general_dilated(
        x, weight, window_strides=(1, 1), padding="VALID",
        dimension_numbers=("NCHW", "OIHW", "NCHW"))
    out = out + bias[None, :, None, None]
    mask = (weight_aux > 0).astype(out.dtype)
    return out * mask[None, :, None, None]


if __name__ == "__main__":
    key = jax.random.PRNGKey(0)
    x_key, p_key = jax.random.split(key)

    N, Cin, H, W = 2, 4, 16, 16
    Cout, k = 8, 3

    x = jax.random.normal(x_key, (N, Cin, H, W), dtype=jnp.float32)
    weight, weight_aux, bias = init_params(p_key, Cin, Cout, k)

    out = conv2d_layer_n(x, weight, bias, weight_aux)
    out = jax.block_until_ready(out)

    ref = reference_forward(x, weight, bias, weight_aux)
    assert out.shape == ref.shape == (N, Cout, H - k + 1, W - k + 1)
    # bf16 MXU operands (f32 accumulation) -> loosened tolerance vs f32 reference.
    assert jnp.allclose(out, ref, atol=3e-2, rtol=3e-2)

    print("KERNEL_OK")
</pallas_src>

<mosaic_0001>
module attributes {stable_mosaic.version = 11 : i64} {
  func.func @_gemm_bias_resident_kernel(%arg0: i32, %arg1: memref<256x128xbf16, #tpu.memory_space<vmem>>, %arg2: memref<128x128xbf16, #tpu.memory_space<vmem>>, %arg3: memref<1x128xf32, #tpu.memory_space<vmem>>, %arg4: memref<256x128xf32, #tpu.memory_space<vmem>>) attributes {dimension_semantics = [#tpu.dimension_semantics<parallel>], iteration_bounds = array<i64: 2>, scalar_prefetch = 0 : i64, scratch_operands = 0 : i64, tpu.core_type = #tpu.core_type<tc>, window_params = [{transform_indices = @transform_0, window_bounds = array<i64: 256, 128>}, {pipeline_mode = #tpu.pipeline_mode<synchronous>, transform_indices = @transform_1, window_bounds = array<i64: 128, 128>}, {pipeline_mode = #tpu.pipeline_mode<synchronous>, transform_indices = @transform_2, window_bounds = array<i64: 1, 128>}, {transform_indices = @transform_3, window_bounds = array<i64: 256, 128>}]} {
    %c0 = arith.constant 0 : index
    %c0_0 = arith.constant 0 : index
    %0 = vector.load %arg1[%c0, %c0_0] : memref<256x128xbf16, #tpu.memory_space<vmem>>, vector<256x128xbf16>
    %c0_1 = arith.constant 0 : index
    %c0_2 = arith.constant 0 : index
    %1 = vector.load %arg2[%c0_1, %c0_2] : memref<128x128xbf16, #tpu.memory_space<vmem>>, vector<128x128xbf16>
    %cst = arith.constant dense<0.000000e+00> : vector<256x128xf32>
    %2 = tpu.matmul %0, %1, %cst {dimension_numbers = #tpu.dot_dimension_numbers<[1], [0], [0], [1], [0, 0, 1, 1], [], []>} : vector<256x128xbf16>, vector<128x128xbf16>, vector<256x128xf32> -> vector<256x128xf32>
    %c0_3 = arith.constant 0 : index
    %c0_4 = arith.constant 0 : index
    %3 = vector.load %arg3[%c0_3, %c0_4] : memref<1x128xf32, #tpu.memory_space<vmem>>, vector<1x128xf32>
    %4 = vector.broadcast %3 : vector<1x128xf32> to vector<256x128xf32>
    %5 = arith.addf %2, %4 : vector<256x128xf32>
    %c0_5 = arith.constant 0 : index
    %c0_6 = arith.constant 0 : index
    %6 = vector.load %arg4[%c0_5, %c0_6] : memref<256x128xf32, #tpu.memory_space<vmem>>, vector<256x128xf32>
    tpu.vector_store %arg4[%c0_5, %c0_6], %5 {strides = array<i32>} : memref<256x128xf32, #tpu.memory_space<vmem>>, vector<256x128xf32>,
    return
  }
  func.func @transform_0(%arg0: i32) -> (i32, i32) {
    %c0_i32 = arith.constant 0 : i32
    %c0_i32_0 = arith.constant 0 : i32
    return %arg0, %c0_i32 : i32, i32
  }
  func.func @transform_1(%arg0: i32) -> (i32, i32) {
    %c0_i32 = arith.constant 0 : i32
    %c0_i32_0 = arith.constant 0 : i32
    %c0_i32_1 = arith.constant 0 : i32
    return %c0_i32, %c0_i32_0 : i32, i32
  }
  func.func @transform_2(%arg0: i32) -> (i32, i32) {
    %c0_i32 = arith.constant 0 : i32
    %c0_i32_0 = arith.constant 0 : i32
    %c0_i32_1 = arith.constant 0 : i32
    return %c0_i32, %c0_i32_0 : i32, i32
  }
  func.func @transform_3(%arg0: i32) -> (i32, i32) {
    %c0_i32 = arith.constant 0 : i32
    %c0_i32_0 = arith.constant 0 : i32
    return %arg0, %c0_i32 : i32, i32
  }
}

</mosaic_0001>

<llo_original>
// kernel: tpu_custom_call.1
$region0: #{tpu_custom_call.1}
  #allocation0 [shape = 'u32[]', space=smem, size = 0x4, offset = 0x4, fixed_abs, tag = 'smem constant byte address 0x4 - core index']
  #allocation1 [shape = 'u32[144,128]{1,0:T(1,128)}', space=vmem, size = 0x12000, scoped, tag = 'internal scratch']
  %s0 = inlined_call_operand.hbm [shape: bf16[392,128], index: 0, kind: input, shape index: {}]
  %s1 = inlined_call_operand.hbm [shape: bf16[128,128], index: 1, kind: input, shape index: {}]
  %s2 = inlined_call_operand.vmem [shape: f32[1,128], index: 2, kind: input, shape index: {}]
  %s3 = inlined_call_operand.hbm [shape: f32[392,128], index: 3, kind: output, shape index: {}]
  %s4 = sld [smem:[#allocation0]]
  $region53: #{tpu_custom_call.1} parent=0
    _
  %s6 = ssub.s32 1, %s4
  %s7 = scalar_select 0, %s6, %s4
  $region1: #{tpu_custom_call.1} parent=0
    #allocation2 [shape = 'u8[131072]{0}', space=vmem, size = 0x20000, scoped, tag = 'input window, operand 0']
    #allocation3 [shape = 's32[2]{0}', space=sflag, size = 0x8, scoped, tag = 'scoped memory for tpu_custom_call.1']
    #allocation4 [shape = 's32[2]{0}', space=sflag, size = 0x8, scoped, tag = 'scoped memory for tpu_custom_call.1']
    #allocation5 [shape = 'u8[32768]{0}', space=vmem, size = 0x8000, scoped, tag = 'input window, operand 1, single buffered']
    #allocation6 [shape = 's32[1]{0}', space=sflag, size = 0x4, scoped, tag = 'scoped memory for tpu_custom_call.1']
    #allocation7 [shape = 'u8[262144]{0}', space=vmem, size = 0x40000, scoped, tag = 'output window, operand 0']
    %8 = vsyncpa [#allocation3], 0
    %s9 = scalar_lea.sflag [#allocation3], 1
    %10 = vsyncpa %s9, 0
    %11 = vsyncpa [#allocation6], 0
    %12 = vsyncpa [#allocation4], 0
    %s13 = scalar_lea.sflag [#allocation4], 1
    %14 = vsyncpa %s13, 0
    loop: start=0, step=1, limit=4
    $region2: #{tpu_custom_call.1} parent=1 // loop_pre_header
      _
    $region3: #{tpu_custom_call.1} parent=1 // loop_header
      %s16 = sphi 0, %s20
      %p17 = scmp.ge.s32.totalorder %s16, 4
      %s26 = sphi 0, %s28
      %s29 = sphi 0, %s26
      %s30 = sphi 0, %s29
      %s46 = sphi 0, %s30
      %s50 = sphi 0, %s50
      %s52 = sphi 0, %s50
      %s53 = sphi 0, %s52
      %s67 = sphi 0, %s53
      %s71 = sphi 0, %s71
      %s73 = sphi 0, %s71
      %s74 = sphi 0, %s73
      %s88 = sphi 0, %s74
      %s94 = sphi 0, %s96
      %s97 = sphi 0, %s94
      %s98 = sphi 0, %s97
      %s114 = sphi 0, %s98
    $region4: #{tpu_custom_call.1} parent=1 // loop_header_branch
      %19 = sbr.rel (%p17) target = $region8
    $region5: #{tpu_custom_call.1} parent=1 // loop_body
      %s21 = ssub.s32 %s16, 1
      %s22 = ssub.s32 %s16, 2
      %s23 = sadd.s32 %s16, 1
      %s24 = ssub.s32 %s16, %s23
      %p25 = scmp.eq.s32.totalorder %s24, 0
      %s27 = sadd.s32 %s26, 1
      %s28 = scalar_select %p25, %s26, %s27
      %p31 = pneg %p25
      %p32 = scmp.eq.s32.totalorder %s16, 1
      %p33 = por %p31, %p32
      %p34 = scmp.ne.s32.totalorder %s26, %s29
      %p35 = scmp.eq.s32.totalorder %s16, 0
      %p36 = por %p34, %p35
      %p37 = scmp.ne.s32.totalorder %s26, %s29
      %p38 = scmp.eq.s32.totalorder %s21, 1
      %p39 = por %p37, %p38
      %p40 = scmp.ne.s32.totalorder %s29, %s30
      %p41 = scmp.eq.s32.totalorder %s21, 0
      %p42 = por %p40, %p41
      %p43 = scmp.ne.s32.totalorder %s29, %s30
      %p44 = scmp.eq.s32.totalorder %s22, 1
      %p45 = por %p43, %p44
      %p47 = scmp.ne.s32.totalorder %s30, %s46
      %p48 = scmp.eq.s32.totalorder %s22, 0
      %p49 = por %p47, %p48
      %s51 = sadd.s32 %s50, 1
      %p54 = scmp.eq.s32.totalorder %s16, 1
      %p55 = scmp.ne.s32.totalorder %s50, %s52
      %p56 = scmp.eq.s32.totalorder %s16, 0
      %p57 = por %p55, %p56
      %p58 = scmp.ne.s32.totalorder %s50, %s52
      %p59 = scmp.eq.s32.totalorder %s21, 1
      %p60 = por %p58, %p59
      %p61 = scmp.ne.s32.totalorder %s52, %s53
      %p62 = scmp.eq.s32.totalorder %s21, 0
      %p63 = por %p61, %p62
      %p64 = scmp.ne.s32.totalorder %s52, %s53
      %p65 = scmp.eq.s32.totalorder %s22, 1
      %p66 = por %p64, %p65
      %p68 = scmp.ne.s32.totalorder %s53, %s67
      %p69 = scmp.eq.s32.totalorder %s22, 0
      %p70 = por %p68, %p69
      %s72 = sadd.s32 %s71, 1
      %p75 = scmp.eq.s32.totalorder %s16, 1
      %p76 = scmp.ne.s32.totalorder %s71, %s73
      %p77 = scmp.eq.s32.totalorder %s16, 0
      %p78 = por %p76, %p77
      %p79 = scmp.ne.s32.totalorder %s71, %s73
      %p80 = scmp.eq.s32.totalorder %s21, 1
      %p81 = por %p79, %p80
      %p82 = scmp.ne.s32.totalorder %s73, %s74
      %p83 = scmp.eq.s32.totalorder %s21, 0
      %p84 = por %p82, %p83
      %p85 = scmp.ne.s32.totalorder %s73, %s74
      %p86 = scmp.eq.s32.totalorder %s22, 1
      %p87 = por %p85, %p86
      %p89 = scmp.ne.s32.totalorder %s74, %s88
      %p90 = scmp.eq.s32.totalorder %s22, 0
      %p91 = por %p89, %p90
      %s92 = ssub.s32 %s16, %s23
      %p93 = scmp.eq.s32.totalorder %s92, 0
      %s95 = sadd.s32 %s94, 1
      %s96 = scalar_select %p93, %s94, %s95
      %p99 = pneg %p93
      %p100 = scmp.eq.s32.totalorder %s16, 1
      %p101 = por %p99, %p100
      %p102 = scmp.ne.s32.totalorder %s94, %s97
      %p103 = scmp.eq.s32.totalorder %s16, 0
      %p104 = por %p102, %p103
      %p105 = scmp.ne.s32.totalorder %s94, %s97
      %p106 = scmp.eq.s32.totalorder %s21, 1
      %p107 = por %p105, %p106
      %p108 = scmp.ne.s32.totalorder %s97, %s98
      %p109 = scmp.eq.s32.totalorder %s21, 0
      %p110 = por %p108, %p109
      %p111 = scmp.ne.s32.totalorder %s97, %s98
      %p112 = scmp.eq.s32.totalorder %s22, 1
      %p113 = por %p111, %p112
      %p115 = scmp.ne.s32.totalorder %s98, %s114
      %p116 = scmp.eq.s32.totalorder %s22, 0
      %p117 = por %p115, %p116
      %p118 = scmp.le.s32.totalorder 1, %s16
      %p119 = scmp.lt.s32.totalorder %s16, 3
      %p120 = pnand %p118, %p119
      %p121 = pneg %p120
      // Predicated region
      $region9: #{tpu_custom_call.1} parent=5 // pred_check
        _
      $region10: #{tpu_custom_call.1} parent=5 // pred_check_branch
        %123 = sbr.rel (%p120) target = $region12
      $region11: #{tpu_custom_call.1} parent=5 // pred_region
        %s124 = ssub.s32 %s16, 1
        // Predicated region
        $region13: #{tpu_custom_call.1} parent=11 // pred_check
          %p125 = pneg %p63
        $region14: #{tpu_custom_call.1} parent=11 // pred_check_branch
          %127 = sbr.rel (%p125) target = $region16
        $region15: #{tpu_custom_call.1} parent=11 // pred_region
          %s129 = ssub.s32 1024, 1024
          %130 = vsyncadd [#allocation6], %s129
          %s131 = sshll.u32 [#allocation5], 4
          %s132 = int_to_ptr.vmem [resolvable:$true] %s131
          %137 = dma.hbm_to_vmem [thread:$0]  %s1, 1024, %s132, [#allocation6], 64, 64, 4
        $region16: #{tpu_custom_call.1} parent=11 // pred_fallthru
          _
        // Predicated region
        $region17: #{tpu_custom_call.1} parent=11 // pred_check
          %p138 = pneg %p84
        $region18: #{tpu_custom_call.1} parent=11 // pred_check_branch
          %140 = sbr.rel (%p138) target = $region20
        $region19: #{tpu_custom_call.1} parent=11 // pred_region
          _
        $region20: #{tpu_custom_call.1} parent=11 // pred_fallthru
          _
      $region12: #{tpu_custom_call.1} parent=5 // pred_fallthru
        _
      %p141 = scmp.lt.s32.totalorder %s16, 2
      // Predicated region
      $region21: #{tpu_custom_call.1} parent=5 // pred_check
        %p142 = pneg %p141
      $region22: #{tpu_custom_call.1} parent=5 // pred_check_branch
        %144 = sbr.rel (%p142) target = $region24
      $region23: #{tpu_custom_call.1} parent=5 // pred_region
        // Predicated region
        $region25: #{tpu_custom_call.1} parent=23 // pred_check
          %p145 = pneg %p36
        $region26: #{tpu_custom_call.1} parent=23 // pred_check_branch
          %147 = sbr.rel (%p145) target = $region28
        $region27: #{tpu_custom_call.1} parent=23 // pred_region
          %s148 = sand.u32 %s26, 1
          %s149 = scalar_lea.sflag [#allocation3], %s148
          %s150 = sand.u32 %s26, 1
          %s151 = smul.addr %s150, 128
          %s152 = scalar_lea.vmem [#allocation2], %s151
          %s153 = smul.u32 32, %s16
          %s154 = ssub.s32 49, %s153
          %p155 = scmp.lt.s32.totalorder %s154, 32
          %s156 = scalar_select %p155, %s154, 32
          %s157 = smul.u32 64, %s156
          %s159 = ssub.s32 2048, %s157
          %160 = vsyncadd %s149, %s159
          %p161 = scmp.ne.s32.totalorder 0, %s157
          %s162 = smul.addr %s153, 64
          %s163 = scalar_lea.hbm %s0, %s162
          %s164 = smul.u32 4, %s156
          %s165 = sshll.u32 %s152, 4
          %s166 = int_to_ptr.vmem [resolvable:$true] %s165
          %s167 = sshll.u32 %s164, 4
          %171 = dma.hbm_to_vmem [thread:$0]  (%p161), %s163, %s167, %s166, %s149, 64, 64, 4
        $region28: #{tpu_custom_call.1} parent=23 // pred_fallthru
          _
      $region24: #{tpu_custom_call.1} parent=5 // pred_fallthru
        _
      %p172 = scmp.le.s32.totalorder 1, %s16
      %p173 = scmp.lt.s32.totalorder %s16, 3
      %p174 = pnand %p172, %p173
      %p175 = pneg %p174
      // Predicated region
      $region29: #{tpu_custom_call.1} parent=5 // pred_check
        _
      $region30: #{tpu_custom_call.1} parent=5 // pred_check_branch
        %177 = sbr.rel (%p174) target = $region32
      $region31: #{tpu_custom_call.1} parent=5 // pred_region
        %s178 = ssub.s32 %s16, 1
        %s179 = sand.u32 %s29, 1
        %s180 = scalar_lea.sflag [#allocation3], %s179
        %s181 = sand.u32 %s29, 1
        %s182 = smul.addr %s181, 128
        %s183 = scalar_lea.vmem [#allocation2], %s182
        // Predicated region
        $region33: #{tpu_custom_call.1} parent=31 // pred_check
          %p184 = pneg %p42
        $region34: #{tpu_custom_call.1} parent=31 // pred_check_branch
          %186 = sbr.rel (%p184) target = $region36
        $region35: #{tpu_custom_call.1} parent=31 // pred_region
          %187 = dma.done %s180, 2048
        $region36: #{tpu_custom_call.1} parent=31 // pred_fallthru
          _
        // Predicated region
        $region37: #{tpu_custom_call.1} parent=31 // pred_check
          %p188 = pneg %p63
        $region38: #{tpu_custom_call.1} parent=31 // pred_check_branch
          %190 = sbr.rel (%p188) target = $region40
        $region39: #{tpu_custom_call.1} parent=31 // pred_region
          %191 = dma.done [#allocation6], 1024
        $region40: #{tpu_custom_call.1} parent=31 // pred_fallthru
          _
        %s192 = sand.u32 %s29, 1
        %s193 = scalar_lea.sflag [#allocation3], %s192
        %s194 = sand.u32 %s29, 1
        %s195 = smul.addr %s194, 128
        %s196 = scalar_lea.vmem [#allocation2], %s195
        %p197 = pneg %p42
        %p198 = pneg %p39
        %p199 = pneg %p63
        %p200 = pneg %p60
        %p201 = pneg %p84
        %p202 = pneg %p81
        %p203 = pneg %p110
        %p204 = pneg %p107
        %s205 = sand.u32 %s97, 1
        %s206 = scalar_lea.sflag [#allocation4], %s205
        %s207 = sand.u32 %s97, 1
        %s208 = smul.addr %s207, 256
        %s209 = scalar_lea.vmem [#allocation7], %s208
        %s210 = smul.u32 32, %s21
        %s211 = ssub.s32 49, %s210
        %p212 = scmp.lt.s32.totalorder %s211, 32
        %s213 = scalar_select %p212, %s211, 32
        %s214 = smul.u32 64, %s213
        %s215 = smul.u32 32, %s21
        %s216 = ssub.s32 49, %s215
        %p217 = scmp.lt.s32.totalorder %s216, 32
        %s218 = scalar_select %p217, %s216, 32
        %s219 = smul.u32 128, %s218
        %v221 = vld [vmem:[%s183] sm:$0xf]
        %v222 = vld [vmem:[%s183 + $0x4] sm:$0xf]
        %v223 = vld [vmem:[%s183 + $0x8] sm:$0xf]
        %v224 = vld [vmem:[%s183 + $0xc] sm:$0xf]
        %v225 = vld [vmem:[%s183 + $0x10] sm:$0xf]
        %v226 = vld [vmem:[%s183 + $0x14] sm:$0xf]
        %v227 = vld [vmem:[%s183 + $0x18] sm:$0xf]
        %v228 = vld [vmem:[%s183 + $0x1c] sm:$0xf]
        %v229 = vld [vmem:[%s183 + $0x20] sm:$0xf]
        %v230 = vld [vmem:[%s183 + $0x24] sm:$0xf]
        %v231 = vld [vmem:[%s183 + $0x28] sm:$0xf]
        %v232 = vld [vmem:[%s183 + $0x2c] sm:$0xf]
        %v233 = vld [vmem:[%s183 + $0x30] sm:$0xf]
        %v234 = vld [vmem:[%s183 + $0x34] sm:$0xf]
        %v235 = vld [vmem:[%s183 + $0x38] sm:$0xf]
        %v236 = vld [vmem:[%s183 + $0x3c] sm:$0xf]
        %v237 = vld [vmem:[%s183 + $0x40] sm:$0xf]
        %v238 = vld [vmem:[%s183 + $0x44] sm:$0xf]
        %v239 = vld [vmem:[%s183 + $0x48] sm:$0xf]
        %v240 = vld [vmem:[%s183 + $0x4c] sm:$0xf]
        %v241 = vld [vmem:[%s183 + $0x50] sm:$0xf]
        %v242 = vld [vmem:[%s183 + $0x54] sm:$0xf]
        %v243 = vld [vmem:[%s183 + $0x58] sm:$0xf]
        %v244 = vld [vmem:[%s183 + $0x5c] sm:$0xf]
        %v245 = vld [vmem:[%s183 + $0x60] sm:$0xf]
        %v246 = vld [vmem:[%s183 + $0x64] sm:$0xf]
        %v247 = vld [vmem:[%s183 + $0x68] sm:$0xf]
        %v248 = vld [vmem:[%s183 + $0x6c] sm:$0xf]
        %v249 = vld [vmem:[%s183 + $0x70] sm:$0xf]
        %v250 = vld [vmem:[%s183 + $0x74] sm:$0xf]
        %v251 = vld [vmem:[%s183 + $0x78] sm:$0xf]
        %v252 = vld [vmem:[%s183 + $0x7c] sm:$0xf]
        %v253 = vld [vmem:[#allocation5] sm:$0xf]
        %v254 = vld [vmem:[#allocation5 + $0x4] sm:$0xf]
        %v255 = vld [vmem:[#allocation5 + $0x8] sm:$0xf]
        %v256 = vld [vmem:[#allocation5 + $0xc] sm:$0xf]
        %v257 = vld [vmem:[#allocation5 + $0x10] sm:$0xf]
        %v258 = vld [vmem:[#allocation5 + $0x14] sm:$0xf]
        %v259 = vld [vmem:[#allocation5 + $0x18] sm:$0xf]
        %v260 = vld [vmem:[#allocation5 + $0x1c] sm:$0xf]
        %v261 = vld [vmem:[#allocation5 + $0x20] sm:$0xf]
        %v262 = vld [vmem:[#allocation5 + $0x24] sm:$0xf]
        %v263 = vld [vmem:[#allocation5 + $0x28] sm:$0xf]
        %v264 = vld [vmem:[#allocation5 + $0x2c] sm:$0xf]
        %v265 = vld [vmem:[#allocation5 + $0x30] sm:$0xf]
        %v266 = vld [vmem:[#allocation5 + $0x34] sm:$0xf]
        %v267 = vld [vmem:[#allocation5 + $0x38] sm:$0xf]
        %v268 = vld [vmem:[#allocation5 + $0x3c] sm:$0xf]
        %v269 = vld [vmem:[%s2] sm:$0x1]
        %v271 = vlaneseq
        %v272 = vshrl.u32 %v271, 7
        %v273 = vsub.s32 0, %v272
        %v274 = vrot.slane %v269, %v273
        %v308 = vunpack.c.l.b16 %v221
        %v309 = vunpack.c.l.b16 %v222
        %v310 = vunpack.c.l.b16 %v223
        %v311 = vunpack.c.l.b16 %v224
        %v312 = vunpack.c.l.b16 %v225
        %v313 = vunpack.c.l.b16 %v226
        %v314 = vunpack.c.l.b16 %v227
        %v315 = vunpack.c.l.b16 %v228
        %v316 = vunpack.c.l.b16 %v229
        %v317 = vunpack.c.l.b16 %v230
        %v318 = vunpack.c.l.b16 %v231
        %v319 = vunpack.c.l.b16 %v232
        %v320 = vunpack.c.l.b16 %v233
        %v321 = vunpack.c.l.b16 %v234
        %v322 = vunpack.c.l.b16 %v235
        %v323 = vunpack.c.l.b16 %v236
        %v324 = vunpack.c.l.b16 %v237
        %v325 = vunpack.c.l.b16 %v238
        %v326 = vunpack.c.l.b16 %v239
        %v327 = vunpack.c.l.b16 %v240
        %v328 = vunpack.c.l.b16 %v241
        %v329 = vunpack.c.l.b16 %v242
        %v330 = vunpack.c.l.b16 %v243
        %v331 = vunpack.c.l.b16 %v244
        %v332 = vunpack.c.l.b16 %v245
        %v333 = vunpack.c.l.b16 %v246
        %v334 = vunpack.c.l.b16 %v247
        %v335 = vunpack.c.l.b16 %v248
        %v336 = vunpack.c.l.b16 %v249
        %v337 = vunpack.c.l.b16 %v250
        %v338 = vunpack.c.l.b16 %v251
        %v339 = vunpack.c.l.b16 %v252
        %v340 = vpack.c.b16 %v309, %v308
        %v341 = vpack.c.b16 %v311, %v310
        %v342 = vpack.c.b16 %v313, %v312
        %v343 = vpack.c.b16 %v315, %v314
        %v344 = vpack.c.b16 %v317, %v316
        %v345 = vpack.c.b16 %v319, %v318
        %v346 = vpack.c.b16 %v321, %v320
        %v347 = vpack.c.b16 %v323, %v322
        %v348 = vpack.c.b16 %v325, %v324
        %v349 = vpack.c.b16 %v327, %v326
        %v350 = vpack.c.b16 %v329, %v328
        %v351 = vpack.c.b16 %v331, %v330
        %v352 = vpack.c.b16 %v333, %v332
        %v353 = vpack.c.b16 %v335, %v334
        %v354 = vpack.c.b16 %v337, %v336
        %v355 = vpack.c.b16 %v339, %v338
        %v388 = vunpack.c.l.b16 %v253
        %v389 = vunpack.c.l.b16 %v254
        %v390 = vunpack.c.l.b16 %v255
        %v391 = vunpack.c.l.b16 %v256
        %v392 = vunpack.c.l.b16 %v257
        %v393 = vunpack.c.l.b16 %v258
        %v394 = vunpack.c.l.b16 %v259
        %v395 = vunpack.c.l.b16 %v260
        %v396 = vunpack.c.l.b16 %v261
        %v397 = vunpack.c.l.b16 %v262
        %v398 = vunpack.c.l.b16 %v263
        %v399 = vunpack.c.l.b16 %v264
        %v400 = vunpack.c.l.b16 %v265
        %v401 = vunpack.c.l.b16 %v266
        %v402 = vunpack.c.l.b16 %v267
        %v403 = vunpack.c.l.b16 %v268
        %v404 = vpack.c.b16 %v389, %v388
        %v405 = vpack.c.b16 %v391, %v390
        %v406 = vpack.c.b16 %v393, %v392
        %v407 = vpack.c.b16 %v395, %v394
        %v408 = vpack.c.b16 %v397, %v396
        %v409 = vpack.c.b16 %v399, %v398
        %v410 = vpack.c.b16 %v401, %v400
        %v411 = vpack.c.b16 %v403, %v402
        %420 = vmatprep.subr.bf16.mxu0 0
        %421 = vmatpush1.bf16.msra.mxu0 %v411
        %422 = vmatprep.subr.bf16.mxu0 0
        %423 = vmatpush1.bf16.msra.mxu0 %v410
        %424 = vmatprep.subr.bf16.mxu0 0
        %425 = vmatpush1.bf16.msra.mxu0 %v409
        %426 = vmatprep.subr.bf16.mxu0 0
        %427 = vmatpush1.bf16.msra.mxu0 %v408
        %428 = vmatprep.subr.bf16.mxu0 0
        %429 = vmatpush1.bf16.msra.mxu0 %v407
        %430 = vmatprep.subr.bf16.mxu0 0
        %431 = vmatpush1.bf16.msra.mxu0 %v406
        %432 = vmatprep.subr.bf16.mxu0 0
        %433 = vmatpush1.bf16.msra.mxu0 %v405
        %434 = vmatprep.subr.bf16.mxu0 0
        %435 = vmatpush1.bf16.msra.mxu0 %v404
        %436 = vmatprep.subr.bf16.mxu0 0
        %437 = vmatpush2.bf16.msra.mxu0 0
        %438 = vmatprep.subr.bf16.mxu0 0
        %439 = vmatpush2.bf16.msra.mxu0 0
        %440 = vmatprep.subr.bf16.mxu0 0
        %441 = vmatpush2.bf16.msra.mxu0 0
        %442 = vmatprep.subr.bf16.mxu0 0
        %443 = vmatpush2.bf16.msra.mxu0 0
        %444 = vmatprep.subr.bf16.mxu0 0
        %445 = vmatpush2.bf16.msra.mxu0 0
        %446 = vmatprep.subr.bf16.mxu0 0
        %447 = vmatpush2.bf16.msra.mxu0 0
        %448 = vmatprep.subr.bf16.mxu0 0
        %449 = vmatpush2.bf16.msra.mxu0 0
        %450 = vmatprep.subr.bf16.mxu0 0
        %451 = vmatpush2.bf16.msra.mxu0 0
        %452 = vmatprep.mubr.bf16.mxu0 0
        %453 = vmatmul.mubr.bf16.gmra.mxu0 %v340
        %v454 = vpop.f32.mrf.mxu0
        %v455 = vadd.f32 %v274, %v454
        %v456 = vpop.f32.mrf.mxu0
        %v457 = vpop.f32.mrf.mxu0
        %v458 = vadd.f32 %v274, %v457
        %v459 = vpop.f32.mrf.mxu0
        %460 = vmatprep.mubr.bf16.mxu0 0
        %461 = vmatmul.mubr.bf16.gmra.mxu0 %v341
        %v462 = vpop.f32.mrf.mxu0
        %v463 = vadd.f32 %v274, %v462
        %v464 = vpop.f32.mrf.mxu0
        %v465 = vpop.f32.mrf.mxu0
        %v466 = vadd.f32 %v274, %v465
        %v467 = vpop.f32.mrf.mxu0
        %468 = vmatprep.mubr.bf16.mxu0 0
        %469 = vmatmul.mubr.bf16.gmra.mxu0 %v342
        %v470 = vpop.f32.mrf.mxu0
        %v471 = vadd.f32 %v274, %v470
        %v472 = vpop.f32.mrf.mxu0
        %v473 = vpop.f32.mrf.mxu0
        %v474 = vadd.f32 %v274, %v473
        %v475 = vpop.f32.mrf.mxu0
        %476 = vmatprep.mubr.bf16.mxu0 0
        %477 = vmatmul.mubr.bf16.gmra.mxu0 %v343
        %v478 = vpop.f32.mrf.mxu0
        %v479 = vadd.f32 %v274, %v478
        %v480 = vpop.f32.mrf.mxu0
        %v481 = vpop.f32.mrf.mxu0
        %v482 = vadd.f32 %v274, %v481
        %v483 = vpop.f32.mrf.mxu0
        %484 = vmatprep.mubr.bf16.mxu0 0
        %485 = vmatmul.mubr.bf16.gmra.mxu0 %v344
        %v486 = vpop.f32.mrf.mxu0
        %v487 = vadd.f32 %v274, %v486
        %v488 = vpop.f32.mrf.mxu0
        %v489 = vpop.f32.mrf.mxu0
        %v490 = vadd.f32 %v274, %v489
        %v491 = vpop.f32.mrf.mxu0
        %492 = vmatprep.mubr.bf16.mxu0 0
        %493 = vmatmul.mubr.bf16.gmra.mxu0 %v345
        %v494 = vpop.f32.mrf.mxu0
        %v495 = vadd.f32 %v274, %v494
        %v496 = vpop.f32.mrf.mxu0
        %v497 = vpop.f32.mrf.mxu0
        %v498 = vadd.f32 %v274, %v497
        %v499 = vpop.f32.mrf.mxu0
        %500 = vmatprep.mubr.bf16.mxu0 0
        %501 = vmatmul.mubr.bf16.gmra.mxu0 %v346
        %v502 = vpop.f32.mrf.mxu0
        %v503 = vadd.f32 %v274, %v502
        %v504 = vpop.f32.mrf.mxu0
        %v505 = vpop.f32.mrf.mxu0
        %v506 = vadd.f32 %v274, %v505
        %v507 = vpop.f32.mrf.mxu0
        %508 = vmatprep.mubr.bf16.mxu0 0
        %509 = vmatmul.mubr.bf16.gmra.mxu0 %v347
        %v510 = vpop.f32.mrf.mxu0
        %v511 = vadd.f32 %v274, %v510
        %v512 = vpop.f32.mrf.mxu0
        %v513 = vpop.f32.mrf.mxu0
        %v514 = vadd.f32 %v274, %v513
        %v515 = vpop.f32.mrf.mxu0
        %516 = vmatprep.mubr.bf16.mxu0 0
        %517 = vmatmul.mubr.bf16.gmra.mxu0 %v348
        %v518 = vpop.f32.mrf.mxu0
        %v519 = vadd.f32 %v274, %v518
        %v520 = vpop.f32.mrf.mxu0
        %v521 = vpop.f32.mrf.mxu0
        %v522 = vadd.f32 %v274, %v521
        %v523 = vpop.f32.mrf.mxu0
        %524 = vmatprep.mubr.bf16.mxu0 0
        %525 = vmatmul.mubr.bf16.gmra.mxu0 %v349
        %v526 = vpop.f32.mrf.mxu0
        %v527 = vadd.f32 %v274, %v526
        %v528 = vpop.f32.mrf.mxu0
        %v529 = vpop.f32.mrf.mxu0
        %v530 = vadd.f32 %v274, %v529
        %v531 = vpop.f32.mrf.mxu0
        %532 = vmatprep.mubr.bf16.mxu0 0
        %533 = vmatmul.mubr.bf16.gmra.mxu0 %v350
        %v534 = vpop.f32.mrf.mxu0
        %v535 = vadd.f32 %v274, %v534
        %v536 = vpop.f32.mrf.mxu0
        %v537 = vpop.f32.mrf.mxu0
        %v538 = vadd.f32 %v274, %v537
        %v539 = vpop.f32.mrf.mxu0
        %540 = vmatprep.mubr.bf16.mxu0 0
        %541 = vmatmul.mubr.bf16.gmra.mxu0 %v351
        %v542 = vpop.f32.mrf.mxu0
        %v543 = vadd.f32 %v274, %v542
        %v544 = vpop.f32.mrf.mxu0
        %v545 = vpop.f32.mrf.mxu0
        %v546 = vadd.f32 %v274, %v545
        %v547 = vpop.f32.mrf.mxu0
        %548 = vmatprep.mubr.bf16.mxu0 0
        %549 = vmatmul.mubr.bf16.gmra.mxu0 %v352
        %v550 = vpop.f32.mrf.mxu0
        %v551 = vadd.f32 %v274, %v550
        %v552 = vpop.f32.mrf.mxu0
        %v553 = vpop.f32.mrf.mxu0
        %v554 = vadd.f32 %v274, %v553
        %v555 = vpop.f32.mrf.mxu0
        %556 = vmatprep.mubr.bf16.mxu0 0
        %557 = vmatmul.mubr.bf16.gmra.mxu0 %v353
        %v558 = vpop.f32.mrf.mxu0
        %v559 = vadd.f32 %v274, %v558
        %v560 = vpop.f32.mrf.mxu0
        %v561 = vpop.f32.mrf.mxu0
        %v562 = vadd.f32 %v274, %v561
        %v563 = vpop.f32.mrf.mxu0
        %564 = vmatprep.mubr.bf16.mxu0 0
        %565 = vmatmul.mubr.bf16.gmra.mxu0 %v354
        %v566 = vpop.f32.mrf.mxu0
        %v567 = vadd.f32 %v274, %v566
        %v568 = vpop.f32.mrf.mxu0
        %v569 = vpop.f32.mrf.mxu0
        %v570 = vadd.f32 %v274, %v569
        %v571 = vpop.f32.mrf.mxu0
        %572 = vmatprep.mubr.bf16.mxu0 0
        %573 = vmatmul.mubr.bf16.gmra.mxu0 %v355
        %v574 = vpop.f32.mrf.mxu0
        %v575 = vadd.f32 %v274, %v574
        %v576 = vpop.f32.mrf.mxu0
        %v577 = vpop.f32.mrf.mxu0
        %v578 = vadd.f32 %v274, %v577
        %v579 = vpop.f32.mrf.mxu0
        %580 = vdwg.mxu0
        %581 = vst [vmem:[%s209] sm:$0xff] %v455
        %582 = vst [vmem:[%s209 + $0x8] sm:$0xff] %v458
        %583 = vst [vmem:[%s209 + $0x10] sm:$0xff] %v463
        %584 = vst [vmem:[%s209 + $0x18] sm:$0xff] %v466
        %585 = vst [vmem:[%s209 + $0x20] sm:$0xff] %v471
        %586 = vst [vmem:[%s209 + $0x28] sm:$0xff] %v474
        %587 = vst [vmem:[%s209 + $0x30] sm:$0xff] %v479
        %588 = vst [vmem:[%s209 + $0x38] sm:$0xff] %v482
        %589 = vst [vmem:[%s209 + $0x40] sm:$0xff] %v487
        %590 = vst [vmem:[%s209 + $0x48] sm:$0xff] %v490
        %591 = vst [vmem:[%s209 + $0x50] sm:$0xff] %v495
        %592 = vst [vmem:[%s209 + $0x58] sm:$0xff] %v498
        %593 = vst [vmem:[%s209 + $0x60] sm:$0xff] %v503
        %594 = vst [vmem:[%s209 + $0x68] sm:$0xff] %v506
        %595 = vst [vmem:[%s209 + $0x70] sm:$0xff] %v511
        %596 = vst [vmem:[%s209 + $0x78] sm:$0xff] %v514
        %597 = vst [vmem:[%s209 + $0x80] sm:$0xff] %v519
        %598 = vst [vmem:[%s209 + $0x88] sm:$0xff] %v522
        %599 = vst [vmem:[%s209 + $0x90] sm:$0xff] %v527
        %600 = vst [vmem:[%s209 + $0x98] sm:$0xff] %v530
        %601 = vst [vmem:[%s209 + $0xa0] sm:$0xff] %v535
        %602 = vst [vmem:[%s209 + $0xa8] sm:$0xff] %v538
        %603 = vst [vmem:[%s209 + $0xb0] sm:$0xff] %v543
        %604 = vst [vmem:[%s209 + $0xb8] sm:$0xff] %v546
        %605 = vst [vmem:[%s209 + $0xc0] sm:$0xff] %v551
        %606 = vst [vmem:[%s209 + $0xc8] sm:$0xff] %v554
        %607 = vst [vmem:[%s209 + $0xd0] sm:$0xff] %v559
        %608 = vst [vmem:[%s209 + $0xd8] sm:$0xff] %v562
        %609 = vst [vmem:[%s209 + $0xe0] sm:$0xff] %v567
        %610 = vst [vmem:[%s209 + $0xe8] sm:$0xff] %v570
        %611 = vst [vmem:[%s209 + $0xf0] sm:$0xff] %v575
        %612 = vst [vmem:[%s209 + $0xf8] sm:$0xff] %v578
        %s613 = sand.u32 %s97, 1
        %s614 = scalar_lea.sflag [#allocation4], %s613
        %s615 = sand.u32 %s97, 1
        %s616 = smul.addr %s615, 256
        %s617 = scalar_lea.vmem [#allocation7], %s616
        // Predicated region
        $region41: #{tpu_custom_call.1} parent=31 // pred_check
          %p618 = pneg %p107
        $region42: #{tpu_custom_call.1} parent=31 // pred_check_branch
          %620 = sbr.rel (%p618) target = $region44
        $region43: #{tpu_custom_call.1} parent=31 // pred_region
          %s621 = smul.u32 32, %s21
          %s622 = ssub.s32 49, %s621
          %p623 = scmp.lt.s32.totalorder %s622, 32
          %s624 = scalar_select %p623, %s622, 32
          %s625 = smul.u32 128, %s624
          %s627 = ssub.s32 4096, %s625
          %628 = vsyncadd %s614, %s627
          %p629 = scmp.ne.s32.totalorder 0, %s625
          %s630 = smul.addr %s621, 128
          %s631 = scalar_lea.hbm %s3, %s630
          %s632 = smul.u32 8, %s624
          %s633 = sshll.u32 %s617, 4
          %s634 = int_to_ptr.vmem [resolvable:$true] %s633
          %s635 = sshll.u32 %s632, 4
          %639 = dma.vmem_to_hbm [thread:$0]  (%p629), %s634, %s635, %s631, %s614, 128, 128, 8
        $region44: #{tpu_custom_call.1} parent=31 // pred_fallthru
          _
      $region32: #{tpu_custom_call.1} parent=5 // pred_fallthru
        _
      %p640 = scmp.le.s32.totalorder 2, %s16
      // Predicated region
      $region45: #{tpu_custom_call.1} parent=5 // pred_check
        %p641 = pneg %p640
      $region46: #{tpu_custom_call.1} parent=5 // pred_check_branch
        %643 = sbr.rel (%p641) target = $region48
      $region47: #{tpu_custom_call.1} parent=5 // pred_region
        %s644 = ssub.s32 %s16, 2
        // Predicated region
        $region49: #{tpu_custom_call.1} parent=47 // pred_check
          %p645 = pneg %p113
        $region50: #{tpu_custom_call.1} parent=47 // pred_check_branch
          %647 = sbr.rel (%p645) target = $region52
        $region51: #{tpu_custom_call.1} parent=47 // pred_region
          %s648 = sand.u32 %s98, 1
          %s649 = scalar_lea.sflag [#allocation4], %s648
          %s650 = sand.u32 %s98, 1
          %s651 = smul.addr %s650, 256
          %s652 = scalar_lea.vmem [#allocation7], %s651
          %653 = dma.done %s649, 4096
        $region52: #{tpu_custom_call.1} parent=47 // pred_fallthru
          _
      $region48: #{tpu_custom_call.1} parent=5 // pred_fallthru
        _
    $region6: #{tpu_custom_call.1} parent=1 // loop_footer
      %s20 = sadd.s32 1, %s16
    $region7: #{tpu_custom_call.1} parent=1 // loop_footer_branch
      %15 = sbr.rel target = $region3
    $region8: #{tpu_custom_call.1} parent=1 // loop_exit
      _
    %654 = vsyncpa [#allocation3], 1
    %s655 = scalar_lea.sflag [#allocation3], 1
    %656 = vsyncpa %s655, 1
    %657 = vsyncpa [#allocation6], 1
    %658 = vsyncpa [#allocation4], 1
    %s659 = scalar_lea.sflag [#allocation4], 1
    %660 = vsyncpa %s659, 1

</llo_original>
